<compile_context>
chip_gen: v5e
topology: v5e:2x2
jax: 0.10.0
libtpu: 0.0.40
codegen_flags: <defaults>
</compile_context>

<pallas_src>
import functools

import jax
import jax.numpy as jnp
from jax import lax
from jax.experimental import pallas as pl
from jax.experimental.pallas import tpu as pltpu


def _round_up(x, m):
    return ((x + m - 1) // m) * m


def _conv_bn_relu_kernel(p_ref, w_ref, bias_ref, o_ref, *, with_relu):
    # p_ref: (tm, Kp) im2col rows; w_ref: (Kp, Cp) BN-scaled weights;
    # bias_ref: (1, Cp) folded conv-bias + BN shift.
    acc = jnp.dot(p_ref[...], w_ref[...], preferred_element_type=jnp.float32)
    y = acc + bias_ref[...]
    if with_relu:
        y = jnp.maximum(y, 0.0)
    o_ref[...] = y.astype(o_ref.dtype)


def basic_conv_forward(x_nchw, weight, conv_bias, bn_params, *, k, stride=1,
                       with_bn=True, with_relu=True, tm=1024,
                       compute_dtype=jnp.float32):
    """Forward pass of BasicConv. x_nchw: (N, Cin, H, W) float32."""
    n, cin, h, w = x_nchw.shape
    cout = weight.shape[0]
    p = (k - 1) // 2
    ho = (h + 2 * p - k) // stride + 1
    wo = (w + 2 * p - k) // stride + 1

    # ---- glue: NCHW -> NHWC, pad, im2col (pure reshapes / slices) ----
    x_nhwc = jnp.transpose(x_nchw, (0, 2, 3, 1))
    x_pad = jnp.pad(x_nhwc, ((0, 0), (p, p), (p, p), (0, 0)))
    views = []
    for di in range(k):
        for dj in range(k):
            views.append(x_pad[:, di:di + (ho - 1) * stride + 1:stride,
                                  dj:dj + (wo - 1) * stride + 1:stride, :])
    # column order (Cin, kh, kw) to match torch weight (Cout, Cin, kh, kw)
    patches = jnp.stack(views, axis=-1)                   # (N,Ho,Wo,Cin,k*k)
    patches = patches.reshape(n * ho * wo, cin * k * k)

    # ---- fold conv bias + eval-mode BN into weights / per-channel bias ----
    cbias = conv_bias if conv_bias is not None else jnp.zeros((cout,), jnp.float32)
    if with_bn:
        gamma, beta, r_mean, r_var, eps = bn_params
        scale = gamma / jnp.sqrt(r_var + eps)
        bias = beta + (cbias - r_mean) * scale
    else:
        scale = jnp.ones((cout,), jnp.float32)
        bias = cbias
    # Fold BN scale into the weight matrix: kernel epilogue is add(+relu) only.
    w_mat = weight.reshape(cout, cin * k * k).T.astype(jnp.float32) * scale[None, :]

    # ---- pad to lane/sublane-friendly shapes (zero padding, result exact) ----
    kdim = cin * k * k
    kp = _round_up(kdim, 128)      # full-depth, unmasked MXU contraction
    cp = _round_up(cout, 128)      # lane-dense output -> unmasked vst
    m = patches.shape[0]

    # Row tile: large (amortize ~0.35us/step), but keep >=2 grid steps when
    # possible so the "parallel" row axis can shard across megacore TCs.
    m8 = _round_up(m, 8)
    if m8 < 2 * tm:
        tm = max(8, _round_up((m8 + 1) // 2, 8))
    m_pad = _round_up(m, tm)

    patches = jnp.pad(patches, ((0, m_pad - m), (0, kp - kdim)))
    w_mat = jnp.pad(w_mat, ((0, kp - kdim), (0, cp - cout)))
    bias = jnp.pad(bias.astype(jnp.float32), (0, cp - cout)).reshape(1, cp)

    patches = patches.astype(compute_dtype)
    w_mat = w_mat.astype(compute_dtype)

    cost = pl.CostEstimate(
        flops=2 * m_pad * kp * cp,
        transcendentals=0,
        bytes_accessed=patches.nbytes + w_mat.nbytes + bias.nbytes + m_pad * cp * 4,
    )

    kernel = functools.partial(_conv_bn_relu_kernel, with_relu=with_relu)
    out_flat = pl.pallas_call(
        kernel,
        out_shape=jax.ShapeDtypeStruct((m_pad, cp), jnp.float32),
        grid_spec=pltpu.PrefetchScalarGridSpec(
            num_scalar_prefetch=0,
            grid=(m_pad // tm,),
            in_specs=[
                pl.BlockSpec((tm, kp), lambda i: (i, 0)),
                pl.BlockSpec((kp, cp), lambda i: (0, 0)),
                pl.BlockSpec((1, cp), lambda i: (0, 0)),
            ],
            out_specs=pl.BlockSpec((tm, cp), lambda i: (i, 0)),
        ),
        compiler_params=pltpu.CompilerParams(
            dimension_semantics=("parallel",)),
        cost_estimate=cost,
    )(patches, w_mat, bias)

    out_flat = out_flat[:m, :cout]                        # strip row/lane padding
    out_nhwc = out_flat.reshape(n, ho, wo, cout)
    return jnp.transpose(out_nhwc, (0, 3, 1, 2))          # back to NCHW


def _reference(x_nchw, weight, conv_bias, bn_params, *, k, stride, with_bn, with_relu):
    p = (k - 1) // 2
    y = lax.conv_general_dilated(
        x_nchw, weight, window_strides=(stride, stride),
        padding=((p, p), (p, p)),
        dimension_numbers=("NCHW", "OIHW", "NCHW"))
    if conv_bias is not None:
        y = y + conv_bias[None, :, None, None]
    if with_bn:
        gamma, beta, r_mean, r_var, eps = bn_params
        y = (y - r_mean[None, :, None, None]) / jnp.sqrt(r_var + eps)[None, :, None, None]
        y = y * gamma[None, :, None, None] + beta[None, :, None, None]
    if with_relu:
        y = jnp.maximum(y, 0.0)
    return y


if __name__ == "__main__":
    # BasicConv(k=3, inp_dim=4, out_dim=8, stride=1, with_bn=True, with_relu=True)
    K, CIN, COUT, STRIDE = 3, 4, 8, 1
    WITH_BN, WITH_RELU = True, True
    N, H, W = 2, 16, 16

    key = jax.random.PRNGKey(0)
    kx, kw = jax.random.split(key)
    x = jax.random.normal(kx, (N, CIN, H, W), dtype=jnp.float32)
    weight = jax.random.normal(kw, (COUT, CIN, K, K), dtype=jnp.float32) * 0.1
    conv_bias = None if WITH_BN else jnp.zeros((COUT,), jnp.float32)
    # fresh BatchNorm2d params (eval-mode): gamma=1, beta=0, mean=0, var=1
    bn_params = (jnp.ones((COUT,), jnp.float32),
                 jnp.zeros((COUT,), jnp.float32),
                 jnp.zeros((COUT,), jnp.float32),
                 jnp.ones((COUT,), jnp.float32),
                 1e-5)

    ref = _reference(x, weight, conv_bias, bn_params,
                     k=K, stride=STRIDE, with_bn=WITH_BN, with_relu=WITH_RELU)

    # float32 path (exact)
    out = basic_conv_forward(x, weight, conv_bias, bn_params,
                             k=K, stride=STRIDE,
                             with_bn=WITH_BN, with_relu=WITH_RELU,
                             compute_dtype=jnp.float32)
    out = jax.block_until_ready(out)
    assert out.shape == (N, COUT, H, W), out.shape
    assert jnp.max(jnp.abs(out - ref)) < 1e-4

    # bf16 path (recommended on v6e/v7x: halves HBM/VMEM traffic, f32 accum)
    out_bf16 = basic_conv_forward(x, weight, conv_bias, bn_params,
                                  k=K, stride=STRIDE,
                                  with_bn=WITH_BN, with_relu=WITH_RELU,
                                  compute_dtype=jnp.bfloat16)
    out_bf16 = jax.block_until_ready(out_bf16)
    assert jnp.max(jnp.abs(out_bf16 - ref)) < 5e-2

    print("KERNEL_OK")
</pallas_src>

<mosaic_0001>
module attributes {stable_mosaic.version = 11 : i64} {
  func.func @_conv_bn_relu_kernel(%arg0: i32, %arg1: memref<256x128xf32, #tpu.memory_space<vmem>>, %arg2: memref<128x128xf32, #tpu.memory_space<vmem>>, %arg3: memref<1x128xf32, #tpu.memory_space<vmem>>, %arg4: memref<256x128xf32, #tpu.memory_space<vmem>>) attributes {dimension_semantics = [#tpu.dimension_semantics<parallel>], iteration_bounds = array<i64: 2>, scalar_prefetch = 0 : i64, scratch_operands = 0 : i64, tpu.core_type = #tpu.core_type<tc>, window_params = [{transform_indices = @transform_0, window_bounds = array<i64: 256, 128>}, {pipeline_mode = #tpu.pipeline_mode<synchronous>, transform_indices = @transform_1, window_bounds = array<i64: 128, 128>}, {pipeline_mode = #tpu.pipeline_mode<synchronous>, transform_indices = @transform_2, window_bounds = array<i64: 1, 128>}, {transform_indices = @transform_3, window_bounds = array<i64: 256, 128>}]} {
    %c0 = arith.constant 0 : index
    %c0_0 = arith.constant 0 : index
    %0 = vector.load %arg1[%c0, %c0_0] : memref<256x128xf32, #tpu.memory_space<vmem>>, vector<256x128xf32>
    %c0_1 = arith.constant 0 : index
    %c0_2 = arith.constant 0 : index
    %1 = vector.load %arg2[%c0_1, %c0_2] : memref<128x128xf32, #tpu.memory_space<vmem>>, vector<128x128xf32>
    %cst = arith.constant dense<0.000000e+00> : vector<256x128xf32>
    %2 = tpu.matmul %0, %1, %cst {dimension_numbers = #tpu.dot_dimension_numbers<[1], [0], [0], [1], [0, 0, 1, 1], [], []>} : vector<256x128xf32>, vector<128x128xf32>, vector<256x128xf32> -> vector<256x128xf32>
    %c0_3 = arith.constant 0 : index
    %c0_4 = arith.constant 0 : index
    %3 = vector.load %arg3[%c0_3, %c0_4] : memref<1x128xf32, #tpu.memory_space<vmem>>, vector<1x128xf32>
    %4 = vector.broadcast %3 : vector<1x128xf32> to vector<256x128xf32>
    %5 = arith.addf %2, %4 : vector<256x128xf32>
    %cst_5 = arith.constant 0.000000e+00 : f32
    %6 = vector.broadcast %cst_5 : f32 to vector<256x128xf32>
    %7 = arith.maximumf %5, %6 : vector<256x128xf32>
    %c0_6 = arith.constant 0 : index
    %c0_7 = arith.constant 0 : index
    %8 = vector.load %arg4[%c0_6, %c0_7] : memref<256x128xf32, #tpu.memory_space<vmem>>, vector<256x128xf32>
    tpu.vector_store %arg4[%c0_6, %c0_7], %7 {strides = array<i32>} : memref<256x128xf32, #tpu.memory_space<vmem>>, vector<256x128xf32>,
    return
  }
  func.func @transform_0(%arg0: i32) -> (i32, i32) {
    %c0_i32 = arith.constant 0 : i32
    %c0_i32_0 = arith.constant 0 : i32
    return %arg0, %c0_i32 : i32, i32
  }
  func.func @transform_1(%arg0: i32) -> (i32, i32) {
    %c0_i32 = arith.constant 0 : i32
    %c0_i32_0 = arith.constant 0 : i32
    %c0_i32_1 = arith.constant 0 : i32
    return %c0_i32, %c0_i32_0 : i32, i32
  }
  func.func @transform_2(%arg0: i32) -> (i32, i32) {
    %c0_i32 = arith.constant 0 : i32
    %c0_i32_0 = arith.constant 0 : i32
    %c0_i32_1 = arith.constant 0 : i32
    return %c0_i32, %c0_i32_0 : i32, i32
  }
  func.func @transform_3(%arg0: i32) -> (i32, i32) {
    %c0_i32 = arith.constant 0 : i32
    %c0_i32_0 = arith.constant 0 : i32
    return %arg0, %c0_i32 : i32, i32
  }
}

</mosaic_0001>

<llo_original>
// kernel: tpu_custom_call.1
$region0: #{tpu_custom_call.1}
  #allocation0 [shape = 'u32[]', space=smem, size = 0x4, offset = 0x4, fixed_abs, tag = 'smem constant byte address 0x4 - core index']
  #allocation1 [shape = 'u32[72,128]{1,0:T(1,128)}', space=vmem, size = 0x9000, scoped, tag = 'internal scratch']
  %s0 = inlined_call_operand.hbm [shape: f32[512,128], index: 0, kind: input, shape index: {}]
  %s1 = inlined_call_operand.hbm [shape: f32[128,128], index: 1, kind: input, shape index: {}]
  %s2 = inlined_call_operand.vmem [shape: f32[1,128], index: 2, kind: input, shape index: {}]
  %s3 = inlined_call_operand.hbm [shape: f32[512,128], index: 3, kind: output, shape index: {}]
  %s4 = sld [smem:[#allocation0]]
  $region53: #{tpu_custom_call.1} parent=0
    _
  %s6 = ssub.s32 1, %s4
  %s7 = scalar_select 0, %s6, %s4
  $region1: #{tpu_custom_call.1} parent=0
    #allocation2 [shape = 'u8[262144]{0}', space=vmem, size = 0x40000, scoped, tag = 'input window, operand 0']
    #allocation3 [shape = 's32[2]{0}', space=sflag, size = 0x8, scoped, tag = 'scoped memory for tpu_custom_call.1']
    #allocation4 [shape = 's32[2]{0}', space=sflag, size = 0x8, scoped, tag = 'scoped memory for tpu_custom_call.1']
    #allocation5 [shape = 'u8[65536]{0}', space=vmem, size = 0x10000, scoped, tag = 'input window, operand 1, single buffered']
    #allocation6 [shape = 's32[1]{0}', space=sflag, size = 0x4, scoped, tag = 'scoped memory for tpu_custom_call.1']
    #allocation7 [shape = 'u8[262144]{0}', space=vmem, size = 0x40000, scoped, tag = 'output window, operand 0']
    %8 = vsyncpa [#allocation3], 0
    %s9 = scalar_lea.sflag [#allocation3], 1
    %10 = vsyncpa %s9, 0
    %11 = vsyncpa [#allocation6], 0
    %12 = vsyncpa [#allocation4], 0
    %s13 = scalar_lea.sflag [#allocation4], 1
    %14 = vsyncpa %s13, 0
    loop: start=0, step=1, limit=4
    $region2: #{tpu_custom_call.1} parent=1 // loop_pre_header
      _
    $region3: #{tpu_custom_call.1} parent=1 // loop_header
      %s16 = sphi 0, %s20
      %p17 = scmp.ge.s32.totalorder %s16, 4
      %s26 = sphi 0, %s28
      %s29 = sphi 0, %s26
      %s30 = sphi 0, %s29
      %s46 = sphi 0, %s30
      %s50 = sphi 0, %s50
      %s52 = sphi 0, %s50
      %s53 = sphi 0, %s52
      %s67 = sphi 0, %s53
      %s71 = sphi 0, %s71
      %s73 = sphi 0, %s71
      %s74 = sphi 0, %s73
      %s88 = sphi 0, %s74
      %s94 = sphi 0, %s96
      %s97 = sphi 0, %s94
      %s98 = sphi 0, %s97
      %s114 = sphi 0, %s98
    $region4: #{tpu_custom_call.1} parent=1 // loop_header_branch
      %19 = sbr.rel (%p17) target = $region8
    $region5: #{tpu_custom_call.1} parent=1 // loop_body
      %s21 = ssub.s32 %s16, 1
      %s22 = ssub.s32 %s16, 2
      %s23 = sadd.s32 %s16, 1
      %s24 = ssub.s32 %s16, %s23
      %p25 = scmp.eq.s32.totalorder %s24, 0
      %s27 = sadd.s32 %s26, 1
      %s28 = scalar_select %p25, %s26, %s27
      %p31 = pneg %p25
      %p32 = scmp.eq.s32.totalorder %s16, 1
      %p33 = por %p31, %p32
      %p34 = scmp.ne.s32.totalorder %s26, %s29
      %p35 = scmp.eq.s32.totalorder %s16, 0
      %p36 = por %p34, %p35
      %p37 = scmp.ne.s32.totalorder %s26, %s29
      %p38 = scmp.eq.s32.totalorder %s21, 1
      %p39 = por %p37, %p38
      %p40 = scmp.ne.s32.totalorder %s29, %s30
      %p41 = scmp.eq.s32.totalorder %s21, 0
      %p42 = por %p40, %p41
      %p43 = scmp.ne.s32.totalorder %s29, %s30
      %p44 = scmp.eq.s32.totalorder %s22, 1
      %p45 = por %p43, %p44
      %p47 = scmp.ne.s32.totalorder %s30, %s46
      %p48 = scmp.eq.s32.totalorder %s22, 0
      %p49 = por %p47, %p48
      %s51 = sadd.s32 %s50, 1
      %p54 = scmp.eq.s32.totalorder %s16, 1
      %p55 = scmp.ne.s32.totalorder %s50, %s52
      %p56 = scmp.eq.s32.totalorder %s16, 0
      %p57 = por %p55, %p56
      %p58 = scmp.ne.s32.totalorder %s50, %s52
      %p59 = scmp.eq.s32.totalorder %s21, 1
      %p60 = por %p58, %p59
      %p61 = scmp.ne.s32.totalorder %s52, %s53
      %p62 = scmp.eq.s32.totalorder %s21, 0
      %p63 = por %p61, %p62
      %p64 = scmp.ne.s32.totalorder %s52, %s53
      %p65 = scmp.eq.s32.totalorder %s22, 1
      %p66 = por %p64, %p65
      %p68 = scmp.ne.s32.totalorder %s53, %s67
      %p69 = scmp.eq.s32.totalorder %s22, 0
      %p70 = por %p68, %p69
      %s72 = sadd.s32 %s71, 1
      %p75 = scmp.eq.s32.totalorder %s16, 1
      %p76 = scmp.ne.s32.totalorder %s71, %s73
      %p77 = scmp.eq.s32.totalorder %s16, 0
      %p78 = por %p76, %p77
      %p79 = scmp.ne.s32.totalorder %s71, %s73
      %p80 = scmp.eq.s32.totalorder %s21, 1
      %p81 = por %p79, %p80
      %p82 = scmp.ne.s32.totalorder %s73, %s74
      %p83 = scmp.eq.s32.totalorder %s21, 0
      %p84 = por %p82, %p83
      %p85 = scmp.ne.s32.totalorder %s73, %s74
      %p86 = scmp.eq.s32.totalorder %s22, 1
      %p87 = por %p85, %p86
      %p89 = scmp.ne.s32.totalorder %s74, %s88
      %p90 = scmp.eq.s32.totalorder %s22, 0
      %p91 = por %p89, %p90
      %s92 = ssub.s32 %s16, %s23
      %p93 = scmp.eq.s32.totalorder %s92, 0
      %s95 = sadd.s32 %s94, 1
      %s96 = scalar_select %p93, %s94, %s95
      %p99 = pneg %p93
      %p100 = scmp.eq.s32.totalorder %s16, 1
      %p101 = por %p99, %p100
      %p102 = scmp.ne.s32.totalorder %s94, %s97
      %p103 = scmp.eq.s32.totalorder %s16, 0
      %p104 = por %p102, %p103
      %p105 = scmp.ne.s32.totalorder %s94, %s97
      %p106 = scmp.eq.s32.totalorder %s21, 1
      %p107 = por %p105, %p106
      %p108 = scmp.ne.s32.totalorder %s97, %s98
      %p109 = scmp.eq.s32.totalorder %s21, 0
      %p110 = por %p108, %p109
      %p111 = scmp.ne.s32.totalorder %s97, %s98
      %p112 = scmp.eq.s32.totalorder %s22, 1
      %p113 = por %p111, %p112
      %p115 = scmp.ne.s32.totalorder %s98, %s114
      %p116 = scmp.eq.s32.totalorder %s22, 0
      %p117 = por %p115, %p116
      %p118 = scmp.le.s32.totalorder 1, %s16
      %p119 = scmp.lt.s32.totalorder %s16, 3
      %p120 = pnand %p118, %p119
      %p121 = pneg %p120
      // Predicated region
      $region9: #{tpu_custom_call.1} parent=5 // pred_check
        _
      $region10: #{tpu_custom_call.1} parent=5 // pred_check_branch
        %123 = sbr.rel (%p120) target = $region12
      $region11: #{tpu_custom_call.1} parent=5 // pred_region
        %s124 = ssub.s32 %s16, 1
        // Predicated region
        $region13: #{tpu_custom_call.1} parent=11 // pred_check
          %p125 = pneg %p63
        $region14: #{tpu_custom_call.1} parent=11 // pred_check_branch
          %127 = sbr.rel (%p125) target = $region16
        $region15: #{tpu_custom_call.1} parent=11 // pred_region
          %129 = vsyncadd [#allocation6], 0
          %s130 = sshll.u32 %s1, 4
          %s131 = int_to_ptr.hbm [resolvable:$true] %s130
          %s132 = sshll.u32 [#allocation5], 4
          %s133 = int_to_ptr.vmem [resolvable:$true] %s132
          %138 = dma.hbm_to_vmem [thread:$0]  %s131, 2048, %s133, [#allocation6], 128, 128, 8
        $region16: #{tpu_custom_call.1} parent=11 // pred_fallthru
          _
        // Predicated region
        $region17: #{tpu_custom_call.1} parent=11 // pred_check
          %p139 = pneg %p84
        $region18: #{tpu_custom_call.1} parent=11 // pred_check_branch
          %141 = sbr.rel (%p139) target = $region20
        $region19: #{tpu_custom_call.1} parent=11 // pred_region
          _
        $region20: #{tpu_custom_call.1} parent=11 // pred_fallthru
          _
      $region12: #{tpu_custom_call.1} parent=5 // pred_fallthru
        _
      %p142 = scmp.lt.s32.totalorder %s16, 2
      // Predicated region
      $region21: #{tpu_custom_call.1} parent=5 // pred_check
        %p143 = pneg %p142
      $region22: #{tpu_custom_call.1} parent=5 // pred_check_branch
        %145 = sbr.rel (%p143) target = $region24
      $region23: #{tpu_custom_call.1} parent=5 // pred_region
        // Predicated region
        $region25: #{tpu_custom_call.1} parent=23 // pred_check
          %p146 = pneg %p36
        $region26: #{tpu_custom_call.1} parent=23 // pred_check_branch
          %148 = sbr.rel (%p146) target = $region28
        $region27: #{tpu_custom_call.1} parent=23 // pred_region
          %s149 = sand.u32 %s26, 1
          %s150 = scalar_lea.sflag [#allocation3], %s149
          %s151 = sand.u32 %s26, 1
          %s152 = smul.addr %s151, 256
          %s153 = scalar_lea.vmem [#allocation2], %s152
          %s154 = smul.u32 32, %s16
          %156 = vsyncadd %s150, 0
          %s157 = smul.addr %s154, 8
          %s158 = scalar_lea.hbm %s0, %s157
          %s159 = sshll.u32 %s158, 4
          %s160 = int_to_ptr.hbm [resolvable:$true] %s159
          %s161 = sshll.u32 %s153, 4
          %s162 = int_to_ptr.vmem [resolvable:$true] %s161
          %167 = dma.hbm_to_vmem [thread:$0]  %s160, 4096, %s162, %s150, 128, 128, 8
        $region28: #{tpu_custom_call.1} parent=23 // pred_fallthru
          _
      $region24: #{tpu_custom_call.1} parent=5 // pred_fallthru
        _
      %p168 = scmp.le.s32.totalorder 1, %s16
      %p169 = scmp.lt.s32.totalorder %s16, 3
      %p170 = pnand %p168, %p169
      %p171 = pneg %p170
      // Predicated region
      $region29: #{tpu_custom_call.1} parent=5 // pred_check
        _
      $region30: #{tpu_custom_call.1} parent=5 // pred_check_branch
        %173 = sbr.rel (%p170) target = $region32
      $region31: #{tpu_custom_call.1} parent=5 // pred_region
        %s174 = ssub.s32 %s16, 1
        %s175 = sand.u32 %s29, 1
        %s176 = scalar_lea.sflag [#allocation3], %s175
        %s177 = sand.u32 %s29, 1
        %s178 = smul.addr %s177, 256
        %s179 = scalar_lea.vmem [#allocation2], %s178
        // Predicated region
        $region33: #{tpu_custom_call.1} parent=31 // pred_check
          %p180 = pneg %p42
        $region34: #{tpu_custom_call.1} parent=31 // pred_check_branch
          %182 = sbr.rel (%p180) target = $region36
        $region35: #{tpu_custom_call.1} parent=31 // pred_region
          %184 = dma.done %s176, 4096
        $region36: #{tpu_custom_call.1} parent=31 // pred_fallthru
          _
        // Predicated region
        $region37: #{tpu_custom_call.1} parent=31 // pred_check
          %p185 = pneg %p63
        $region38: #{tpu_custom_call.1} parent=31 // pred_check_branch
          %187 = sbr.rel (%p185) target = $region40
        $region39: #{tpu_custom_call.1} parent=31 // pred_region
          %189 = dma.done [#allocation6], 2048
        $region40: #{tpu_custom_call.1} parent=31 // pred_fallthru
          _
        %s190 = sand.u32 %s29, 1
        %s191 = scalar_lea.sflag [#allocation3], %s190
        %s192 = sand.u32 %s29, 1
        %s193 = smul.addr %s192, 256
        %s194 = scalar_lea.vmem [#allocation2], %s193
        %p195 = pneg %p42
        %p196 = pneg %p39
        %p197 = pneg %p63
        %p198 = pneg %p60
        %p199 = pneg %p84
        %p200 = pneg %p81
        %p201 = pneg %p110
        %p202 = pneg %p107
        %s203 = sand.u32 %s97, 1
        %s204 = scalar_lea.sflag [#allocation4], %s203
        %s205 = sand.u32 %s97, 1
        %s206 = smul.addr %s205, 256
        %s207 = scalar_lea.vmem [#allocation7], %s206
        %s208 = smul.u32 32, %s21
        %s209 = smul.u32 32, %s21
        %v210 = vld [vmem:[%s179] sm:$0xff]
        %v211 = vld [vmem:[%s179 + $0x8] sm:$0xff]
        %v212 = vld [vmem:[%s179 + $0x10] sm:$0xff]
        %v213 = vld [vmem:[%s179 + $0x18] sm:$0xff]
        %v214 = vld [vmem:[%s179 + $0x20] sm:$0xff]
        %v215 = vld [vmem:[%s179 + $0x28] sm:$0xff]
        %v216 = vld [vmem:[%s179 + $0x30] sm:$0xff]
        %v217 = vld [vmem:[%s179 + $0x38] sm:$0xff]
        %v218 = vld [vmem:[%s179 + $0x40] sm:$0xff]
        %v219 = vld [vmem:[%s179 + $0x48] sm:$0xff]
        %v220 = vld [vmem:[%s179 + $0x50] sm:$0xff]
        %v221 = vld [vmem:[%s179 + $0x58] sm:$0xff]
        %v222 = vld [vmem:[%s179 + $0x60] sm:$0xff]
        %v223 = vld [vmem:[%s179 + $0x68] sm:$0xff]
        %v224 = vld [vmem:[%s179 + $0x70] sm:$0xff]
        %v225 = vld [vmem:[%s179 + $0x78] sm:$0xff]
        %v226 = vld [vmem:[%s179 + $0x80] sm:$0xff]
        %v227 = vld [vmem:[%s179 + $0x88] sm:$0xff]
        %v228 = vld [vmem:[%s179 + $0x90] sm:$0xff]
        %v229 = vld [vmem:[%s179 + $0x98] sm:$0xff]
        %v230 = vld [vmem:[%s179 + $0xa0] sm:$0xff]
        %v231 = vld [vmem:[%s179 + $0xa8] sm:$0xff]
        %v232 = vld [vmem:[%s179 + $0xb0] sm:$0xff]
        %v233 = vld [vmem:[%s179 + $0xb8] sm:$0xff]
        %v234 = vld [vmem:[%s179 + $0xc0] sm:$0xff]
        %v235 = vld [vmem:[%s179 + $0xc8] sm:$0xff]
        %v236 = vld [vmem:[%s179 + $0xd0] sm:$0xff]
        %v237 = vld [vmem:[%s179 + $0xd8] sm:$0xff]
        %v238 = vld [vmem:[%s179 + $0xe0] sm:$0xff]
        %v239 = vld [vmem:[%s179 + $0xe8] sm:$0xff]
        %v240 = vld [vmem:[%s179 + $0xf0] sm:$0xff]
        %v241 = vld [vmem:[%s179 + $0xf8] sm:$0xff]
        %v242 = vld [vmem:[#allocation5] sm:$0xff]
        %v243 = vld [vmem:[#allocation5 + $0x8] sm:$0xff]
        %v244 = vld [vmem:[#allocation5 + $0x10] sm:$0xff]
        %v245 = vld [vmem:[#allocation5 + $0x18] sm:$0xff]
        %v246 = vld [vmem:[#allocation5 + $0x20] sm:$0xff]
        %v247 = vld [vmem:[#allocation5 + $0x28] sm:$0xff]
        %v248 = vld [vmem:[#allocation5 + $0x30] sm:$0xff]
        %v249 = vld [vmem:[#allocation5 + $0x38] sm:$0xff]
        %v250 = vld [vmem:[#allocation5 + $0x40] sm:$0xff]
        %v251 = vld [vmem:[#allocation5 + $0x48] sm:$0xff]
        %v252 = vld [vmem:[#allocation5 + $0x50] sm:$0xff]
        %v253 = vld [vmem:[#allocation5 + $0x58] sm:$0xff]
        %v254 = vld [vmem:[#allocation5 + $0x60] sm:$0xff]
        %v255 = vld [vmem:[#allocation5 + $0x68] sm:$0xff]
        %v256 = vld [vmem:[#allocation5 + $0x70] sm:$0xff]
        %v257 = vld [vmem:[#allocation5 + $0x78] sm:$0xff]
        %v258 = vld [vmem:[%s2] sm:$0x1]
        %v260 = vperm.slane %v258, 0
        %262 = vmatpush.msra.mxu0 %v257
        %263 = vmatpush.msra.mxu0 %v256
        %264 = vmatpush.msra.mxu0 %v255
        %265 = vmatpush.msra.mxu0 %v254
        %266 = vmatpush.msra.mxu0 %v253
        %267 = vmatpush.msra.mxu0 %v252
        %268 = vmatpush.msra.mxu0 %v251
        %269 = vmatpush.msra.mxu0 %v250
        %270 = vmatpush.msra.mxu0 %v249
        %271 = vmatpush.msra.mxu0 %v248
        %272 = vmatpush.msra.mxu0 %v247
        %273 = vmatpush.msra.mxu0 %v246
        %274 = vmatpush.msra.mxu0 %v245
        %275 = vmatpush.msra.mxu0 %v244
        %276 = vmatpush.msra.mxu0 %v243
        %277 = vmatpush.msra.mxu0 %v242
        %278 = vmatmul.f32.gmra.mxu0 %v210
        %v279 = vpop.f32.mrf.mxu0
        %v280 = vadd.f32 %v260, %v279
        %281 = vmatmul.f32.gmra.mxu0 %v211
        %v282 = vpop.f32.mrf.mxu0
        %v283 = vadd.f32 %v260, %v282
        %284 = vmatmul.f32.gmra.mxu0 %v212
        %v285 = vpop.f32.mrf.mxu0
        %v286 = vadd.f32 %v260, %v285
        %287 = vmatmul.f32.gmra.mxu0 %v213
        %v288 = vpop.f32.mrf.mxu0
        %v289 = vadd.f32 %v260, %v288
        %290 = vmatmul.f32.gmra.mxu0 %v214
        %v291 = vpop.f32.mrf.mxu0
        %v292 = vadd.f32 %v260, %v291
        %293 = vmatmul.f32.gmra.mxu0 %v215
        %v294 = vpop.f32.mrf.mxu0
        %v295 = vadd.f32 %v260, %v294
        %296 = vmatmul.f32.gmra.mxu0 %v216
        %v297 = vpop.f32.mrf.mxu0
        %v298 = vadd.f32 %v260, %v297
        %299 = vmatmul.f32.gmra.mxu0 %v217
        %v300 = vpop.f32.mrf.mxu0
        %v301 = vadd.f32 %v260, %v300
        %302 = vmatmul.f32.gmra.mxu0 %v218
        %v303 = vpop.f32.mrf.mxu0
        %v304 = vadd.f32 %v260, %v303
        %305 = vmatmul.f32.gmra.mxu0 %v219
        %v306 = vpop.f32.mrf.mxu0
        %v307 = vadd.f32 %v260, %v306
        %308 = vmatmul.f32.gmra.mxu0 %v220
        %v309 = vpop.f32.mrf.mxu0
        %v310 = vadd.f32 %v260, %v309
        %311 = vmatmul.f32.gmra.mxu0 %v221
        %v312 = vpop.f32.mrf.mxu0
        %v313 = vadd.f32 %v260, %v312
        %314 = vmatmul.f32.gmra.mxu0 %v222
        %v315 = vpop.f32.mrf.mxu0
        %v316 = vadd.f32 %v260, %v315
        %317 = vmatmul.f32.gmra.mxu0 %v223
        %v318 = vpop.f32.mrf.mxu0
        %v319 = vadd.f32 %v260, %v318
        %320 = vmatmul.f32.gmra.mxu0 %v224
        %v321 = vpop.f32.mrf.mxu0
        %v322 = vadd.f32 %v260, %v321
        %323 = vmatmul.f32.gmra.mxu0 %v225
        %v324 = vpop.f32.mrf.mxu0
        %v325 = vadd.f32 %v260, %v324
        %326 = vmatmul.f32.gmra.mxu0 %v226
        %v327 = vpop.f32.mrf.mxu0
        %v328 = vadd.f32 %v260, %v327
        %329 = vmatmul.f32.gmra.mxu0 %v227
        %v330 = vpop.f32.mrf.mxu0
        %v331 = vadd.f32 %v260, %v330
        %332 = vmatmul.f32.gmra.mxu0 %v228
        %v333 = vpop.f32.mrf.mxu0
        %v334 = vadd.f32 %v260, %v333
        %335 = vmatmul.f32.gmra.mxu0 %v229
        %v336 = vpop.f32.mrf.mxu0
        %v337 = vadd.f32 %v260, %v336
        %338 = vmatmul.f32.gmra.mxu0 %v230
        %v339 = vpop.f32.mrf.mxu0
        %v340 = vadd.f32 %v260, %v339
        %341 = vmatmul.f32.gmra.mxu0 %v231
        %v342 = vpop.f32.mrf.mxu0
        %v343 = vadd.f32 %v260, %v342
        %344 = vmatmul.f32.gmra.mxu0 %v232
        %v345 = vpop.f32.mrf.mxu0
        %v346 = vadd.f32 %v260, %v345
        %347 = vmatmul.f32.gmra.mxu0 %v233
        %v348 = vpop.f32.mrf.mxu0
        %v349 = vadd.f32 %v260, %v348
        %350 = vmatmul.f32.gmra.mxu0 %v234
        %v351 = vpop.f32.mrf.mxu0
        %v352 = vadd.f32 %v260, %v351
        %353 = vmatmul.f32.gmra.mxu0 %v235
        %v354 = vpop.f32.mrf.mxu0
        %v355 = vadd.f32 %v260, %v354
        %356 = vmatmul.f32.gmra.mxu0 %v236
        %v357 = vpop.f32.mrf.mxu0
        %v358 = vadd.f32 %v260, %v357
        %359 = vmatmul.f32.gmra.mxu0 %v237
        %v360 = vpop.f32.mrf.mxu0
        %v361 = vadd.f32 %v260, %v360
        %362 = vmatmul.f32.gmra.mxu0 %v238
        %v363 = vpop.f32.mrf.mxu0
        %v364 = vadd.f32 %v260, %v363
        %365 = vmatmul.f32.gmra.mxu0 %v239
        %v366 = vpop.f32.mrf.mxu0
        %v367 = vadd.f32 %v260, %v366
        %368 = vmatmul.f32.gmra.mxu0 %v240
        %v369 = vpop.f32.mrf.mxu0
        %v370 = vadd.f32 %v260, %v369
        %371 = vmatmul.f32.gmra.mxu0 %v241
        %v372 = vpop.f32.mrf.mxu0
        %v373 = vadd.f32 %v260, %v372
        %374 = vdwg.mxu0
        %v375 = vmax.f32 %v280, 0.0
        %v376 = vmax.f32 %v283, 0.0
        %v377 = vmax.f32 %v286, 0.0
        %v378 = vmax.f32 %v289, 0.0
        %v379 = vmax.f32 %v292, 0.0
        %v380 = vmax.f32 %v295, 0.0
        %v381 = vmax.f32 %v298, 0.0
        %v382 = vmax.f32 %v301, 0.0
        %v383 = vmax.f32 %v304, 0.0
        %v384 = vmax.f32 %v307, 0.0
        %v385 = vmax.f32 %v310, 0.0
        %v386 = vmax.f32 %v313, 0.0
        %v387 = vmax.f32 %v316, 0.0
        %v388 = vmax.f32 %v319, 0.0
        %v389 = vmax.f32 %v322, 0.0
        %v390 = vmax.f32 %v325, 0.0
        %v391 = vmax.f32 %v328, 0.0
        %v392 = vmax.f32 %v331, 0.0
        %v393 = vmax.f32 %v334, 0.0
        %v394 = vmax.f32 %v337, 0.0
        %v395 = vmax.f32 %v340, 0.0
        %v396 = vmax.f32 %v343, 0.0
        %v397 = vmax.f32 %v346, 0.0
        %v398 = vmax.f32 %v349, 0.0
        %v399 = vmax.f32 %v352, 0.0
        %v400 = vmax.f32 %v355, 0.0
        %v401 = vmax.f32 %v358, 0.0
        %v402 = vmax.f32 %v361, 0.0
        %v403 = vmax.f32 %v364, 0.0
        %v404 = vmax.f32 %v367, 0.0
        %v405 = vmax.f32 %v370, 0.0
        %v406 = vmax.f32 %v373, 0.0
        %407 = vst [vmem:[%s207] sm:$0xff] %v375
        %408 = vst [vmem:[%s207 + $0x8] sm:$0xff] %v376
        %409 = vst [vmem:[%s207 + $0x10] sm:$0xff] %v377
        %410 = vst [vmem:[%s207 + $0x18] sm:$0xff] %v378
        %411 = vst [vmem:[%s207 + $0x20] sm:$0xff] %v379
        %412 = vst [vmem:[%s207 + $0x28] sm:$0xff] %v380
        %413 = vst [vmem:[%s207 + $0x30] sm:$0xff] %v381
        %414 = vst [vmem:[%s207 + $0x38] sm:$0xff] %v382
        %415 = vst [vmem:[%s207 + $0x40] sm:$0xff] %v383
        %416 = vst [vmem:[%s207 + $0x48] sm:$0xff] %v384
        %417 = vst [vmem:[%s207 + $0x50] sm:$0xff] %v385
        %418 = vst [vmem:[%s207 + $0x58] sm:$0xff] %v386
        %419 = vst [vmem:[%s207 + $0x60] sm:$0xff] %v387
        %420 = vst [vmem:[%s207 + $0x68] sm:$0xff] %v388
        %421 = vst [vmem:[%s207 + $0x70] sm:$0xff] %v389
        %422 = vst [vmem:[%s207 + $0x78] sm:$0xff] %v390
        %423 = vst [vmem:[%s207 + $0x80] sm:$0xff] %v391
        %424 = vst [vmem:[%s207 + $0x88] sm:$0xff] %v392
        %425 = vst [vmem:[%s207 + $0x90] sm:$0xff] %v393
        %426 = vst [vmem:[%s207 + $0x98] sm:$0xff] %v394
        %427 = vst [vmem:[%s207 + $0xa0] sm:$0xff] %v395
        %428 = vst [vmem:[%s207 + $0xa8] sm:$0xff] %v396
        %429 = vst [vmem:[%s207 + $0xb0] sm:$0xff] %v397
        %430 = vst [vmem:[%s207 + $0xb8] sm:$0xff] %v398
        %431 = vst [vmem:[%s207 + $0xc0] sm:$0xff] %v399
        %432 = vst [vmem:[%s207 + $0xc8] sm:$0xff] %v400
        %433 = vst [vmem:[%s207 + $0xd0] sm:$0xff] %v401
        %434 = vst [vmem:[%s207 + $0xd8] sm:$0xff] %v402
        %435 = vst [vmem:[%s207 + $0xe0] sm:$0xff] %v403
        %436 = vst [vmem:[%s207 + $0xe8] sm:$0xff] %v404
        %437 = vst [vmem:[%s207 + $0xf0] sm:$0xff] %v405
        %438 = vst [vmem:[%s207 + $0xf8] sm:$0xff] %v406
        %s439 = sand.u32 %s97, 1
        %s440 = scalar_lea.sflag [#allocation4], %s439
        %s441 = sand.u32 %s97, 1
        %s442 = smul.addr %s441, 256
        %s443 = scalar_lea.vmem [#allocation7], %s442
        // Predicated region
        $region41: #{tpu_custom_call.1} parent=31 // pred_check
          %p444 = pneg %p107
        $region42: #{tpu_custom_call.1} parent=31 // pred_check_branch
          %446 = sbr.rel (%p444) target = $region44
        $region43: #{tpu_custom_call.1} parent=31 // pred_region
          %s447 = smul.u32 32, %s21
          %449 = vsyncadd %s440, 0
          %s450 = smul.addr %s447, 8
          %s451 = scalar_lea.hbm %s3, %s450
          %s452 = sshll.u32 %s443, 4
          %s453 = int_to_ptr.vmem [resolvable:$true] %s452
          %s454 = sshll.u32 %s451, 4
          %s455 = int_to_ptr.hbm [resolvable:$true] %s454
          %460 = dma.vmem_to_hbm [thread:$0]  %s453, 4096, %s455, %s440, 128, 128, 8
        $region44: #{tpu_custom_call.1} parent=31 // pred_fallthru
          _
      $region32: #{tpu_custom_call.1} parent=5 // pred_fallthru
        _
      %p461 = scmp.le.s32.totalorder 2, %s16
      // Predicated region
      $region45: #{tpu_custom_call.1} parent=5 // pred_check
        %p462 = pneg %p461
      $region46: #{tpu_custom_call.1} parent=5 // pred_check_branch
        %464 = sbr.rel (%p462) target = $region48
      $region47: #{tpu_custom_call.1} parent=5 // pred_region
        %s465 = ssub.s32 %s16, 2
        // Predicated region
        $region49: #{tpu_custom_call.1} parent=47 // pred_check
          %p466 = pneg %p113
        $region50: #{tpu_custom_call.1} parent=47 // pred_check_branch
          %468 = sbr.rel (%p466) target = $region52
        $region51: #{tpu_custom_call.1} parent=47 // pred_region
          %s469 = sand.u32 %s98, 1
          %s470 = scalar_lea.sflag [#allocation4], %s469
          %s471 = sand.u32 %s98, 1
          %s472 = smul.addr %s471, 256
          %s473 = scalar_lea.vmem [#allocation7], %s472
          %475 = dma.done %s470, 4096
        $region52: #{tpu_custom_call.1} parent=47 // pred_fallthru
          _
      $region48: #{tpu_custom_call.1} parent=5 // pred_fallthru
        _
    $region6: #{tpu_custom_call.1} parent=1 // loop_footer
      %s20 = sadd.s32 1, %s16
    $region7: #{tpu_custom_call.1} parent=1 // loop_footer_branch
      %15 = sbr.rel target = $region3
    $region8: #{tpu_custom_call.1} parent=1 // loop_exit
      _
    %476 = vsyncpa [#allocation3], 1
    %s477 = scalar_lea.sflag [#allocation3], 1
    %478 = vsyncpa %s477, 1
    %479 = vsyncpa [#allocation6], 1
    %480 = vsyncpa [#allocation4], 1
    %s481 = scalar_lea.sflag [#allocation4], 1
    %482 = vsyncpa %s481, 1

</llo_original>
